<compile_context>
chip_gen: v7x
topology: tpu7x:2x2x1
jax: 0.10.0
libtpu: 0.0.40
codegen_flags: <defaults>
</compile_context>

<pallas_src>
import functools

import jax
import jax.numpy as jnp
from jax.experimental import pallas as pl
from jax.experimental.pallas import tpu as pltpu


def _max_last_kernel(x_ref, o_ref, *, neg_fill):
    # Running max across the F-tile grid axis; the o_ref block has the same
    # block index for every j, so it stays resident and acts as the
    # accumulator (standard init/accumulate pattern).
    @pl.when(pl.program_id(1) == 0)
    def _init():
        o_ref[...] = jnp.full_like(o_ref, neg_fill)

    o_ref[...] = jnp.maximum(o_ref[...],
                             jnp.max(x_ref[...], axis=-1, keepdims=True))


def freq_max_pooling(x, *, row_tile=512, freq_tile=2048):
    """max over the last axis, keepdim=True.  x: (..., F) -> (..., 1)."""
    orig_shape = x.shape
    F = orig_shape[-1]
    M = 1
    for d in orig_shape[:-1]:
        M *= d
    x2 = x.reshape(M, F)  # contiguous reshape, no data movement

    # Row tile: second-to-last block dim must be a multiple of 8 or the full
    # extent.  Rows are independent, so a ragged final row tile is safe (edge
    # reads produce garbage rows whose writes land out of bounds and are
    # discarded).
    tm = min(M, row_tile) if (M % 8 == 0) else M

    # Freq tile: last block dim must be a multiple of 128 or the full extent.
    # Only tile F when a clean multiple-of-128 divisor exists (a ragged edge
    # tile would feed garbage lanes into the max).
    if F % 128 == 0 and F > freq_tile:
        tf = freq_tile
        while F % tf != 0:
            tf -= 128
    else:
        tf = F

    if jnp.issubdtype(x.dtype, jnp.floating):
        neg_fill = float("-inf")
    else:
        neg_fill = int(jnp.iinfo(x.dtype).min)

    grid = (pl.cdiv(M, tm), F // tf)
    out2 = pl.pallas_call(
        functools.partial(_max_last_kernel, neg_fill=neg_fill),
        out_shape=jax.ShapeDtypeStruct((M, 1), x.dtype),
        grid=grid,
        in_specs=[pl.BlockSpec((tm, tf), lambda i, j: (i, j))],
        out_specs=pl.BlockSpec((tm, 1), lambda i, j: (i, 0)),
        compiler_params=pltpu.CompilerParams(
            dimension_semantics=("parallel", "arbitrary")),
    )(x2)
    return out2.reshape(orig_shape[:-1] + (1,))


if __name__ == "__main__":
    N, C, T, F = 2, 4, 16, 16
    key = jax.random.PRNGKey(0)
    x = jax.random.normal(key, (N, C, T, F), jnp.float32)

    out = jax.block_until_ready(freq_max_pooling(x))

    ref = jnp.max(x, axis=3, keepdims=True)
    assert out.shape == (N, C, T, 1), out.shape
    err = float(jnp.max(jnp.abs(out - ref)))
    assert err == 0.0, f"max abs error vs reference: {err}"
    print("KERNEL_OK")
</pallas_src>

<mosaic_0001>
module attributes {stable_mosaic.version = 11 : i64} {
  func.func @_max_last_kernel(%arg0: i32, %arg1: i32, %arg2: memref<128x16xf32, #tpu.memory_space<vmem>>, %arg3: memref<128x1xf32, #tpu.memory_space<vmem>>) attributes {dimension_semantics = [#tpu.dimension_semantics<parallel>, #tpu.dimension_semantics<arbitrary>], iteration_bounds = array<i64: 1, 1>, scalar_prefetch = 0 : i64, scratch_operands = 0 : i64, tpu.core_type = #tpu.core_type<tc>, window_params = [{transform_indices = @transform_0, window_bounds = array<i64: 128, 16>}, {transform_indices = @transform_1, window_bounds = array<i64: 128, 1>}]} {
    %c0_i32 = arith.constant 0 : i32
    %0 = arith.cmpi eq, %arg1, %c0_i32 : i32
    %1 = arith.extui %0 : i1 to i32
    %c0_i32_0 = arith.constant 0 : i32
    %2 = arith.cmpi ne, %1, %c0_i32_0 : i32
    scf.if %2 {
      %cst_6 = arith.constant 0xFF800000 : f32
      %9 = vector.broadcast %cst_6 : f32 to vector<128x1xf32>
      %c0_7 = arith.constant 0 : index
      %c0_8 = arith.constant 0 : index
      %10 = vector.load %arg3[%c0_7, %c0_8] : memref<128x1xf32, #tpu.memory_space<vmem>>, vector<128x1xf32>
      tpu.vector_store %arg3[%c0_7, %c0_8], %9 {strides = array<i32>} : memref<128x1xf32, #tpu.memory_space<vmem>>, vector<128x1xf32>,
    } else {
    }
    %c0 = arith.constant 0 : index
    %c0_1 = arith.constant 0 : index
    %3 = vector.load %arg3[%c0, %c0_1] : memref<128x1xf32, #tpu.memory_space<vmem>>, vector<128x1xf32>
    %c0_2 = arith.constant 0 : index
    %c0_3 = arith.constant 0 : index
    %4 = vector.load %arg2[%c0_2, %c0_3] : memref<128x16xf32, #tpu.memory_space<vmem>>, vector<128x16xf32>
    %cst = arith.constant dense<0xFF800000> : vector<128xf32>
    %5 = vector.multi_reduction <maximumf>, %4, %cst [1] : vector<128x16xf32> to vector<128xf32>
    %6 = vector.shape_cast %5 : vector<128xf32> to vector<128x1xf32>
    %7 = arith.maximumf %3, %6 : vector<128x1xf32>
    %c0_4 = arith.constant 0 : index
    %c0_5 = arith.constant 0 : index
    %8 = vector.load %arg3[%c0_4, %c0_5] : memref<128x1xf32, #tpu.memory_space<vmem>>, vector<128x1xf32>
    tpu.vector_store %arg3[%c0_4, %c0_5], %7 {strides = array<i32>} : memref<128x1xf32, #tpu.memory_space<vmem>>, vector<128x1xf32>,
    return
  }
  func.func @transform_0(%arg0: i32, %arg1: i32) -> (i32, i32) {
    %c0_i32 = arith.constant 0 : i32
    return %arg0, %arg1 : i32, i32
  }
  func.func @transform_1(%arg0: i32, %arg1: i32) -> (i32, i32) {
    %c0_i32 = arith.constant 0 : i32
    %c0_i32_0 = arith.constant 0 : i32
    return %arg0, %c0_i32 : i32, i32
  }
}

</mosaic_0001>

<llo_original>
// kernel: tpu_custom_call.1
$region0: #{tpu_custom_call.1}
  #allocation0 [shape = 'u32[]', space=smem, size = 0x4, offset = 0x4, fixed_abs, tag = 'smem constant byte address 0x4 - core index']
  #allocation1 [shape = 'u32[144,128]{1,0:T(1,128)}', space=vmem, size = 0x12000, scoped, tag = 'internal scratch']
  %s0 = inlined_call_operand.vmem [shape: f32[128,16], index: 0, kind: input, shape index: {}]
  %s1 = inlined_call_operand.vmem [shape: f32[128,1], index: 1, kind: output, shape index: {}]
  %s2 = sld [smem:[#allocation0]]
  $region18: #{tpu_custom_call.1} parent=0
    _
  %s4 = ssub.s32 1, %s2
  %s5 = scalar_select 0, %s4, %s2
  // Predicated region
  $region2: #{tpu_custom_call.1} parent=0 // pred_check
    _
  $region3: #{tpu_custom_call.1} parent=0 // pred_check_branch
    %7 = sbr.rel (0) target = $region5
  $region4: #{tpu_custom_call.1} parent=0 // pred_region
    _
  $region5: #{tpu_custom_call.1} parent=0 // pred_fallthru
    _
  %p8 = scmp.eq.s32.totalorder 0, 0
  // Predicated region
  $region6: #{tpu_custom_call.1} parent=0 // pred_check
    %p9 = pneg %p8
  $region7: #{tpu_custom_call.1} parent=0 // pred_check_branch
    %11 = sbr.rel (%p9) target = $region9
  $region8: #{tpu_custom_call.1} parent=0 // pred_region
    %vm12 = vcmask 7168
    %13 = vst.msk [vmem:[%s1] sm:$0xff] %vm12, -inf
    %14 = vst.msk [vmem:[%s1 + $0x8] sm:$0xff] %vm12, -inf
    %15 = vst.msk [vmem:[%s1 + $0x10] sm:$0xff] %vm12, -inf
    %16 = vst.msk [vmem:[%s1 + $0x18] sm:$0xff] %vm12, -inf
    %17 = vst.msk [vmem:[%s1 + $0x20] sm:$0xff] %vm12, -inf
    %18 = vst.msk [vmem:[%s1 + $0x28] sm:$0xff] %vm12, -inf
    %19 = vst.msk [vmem:[%s1 + $0x30] sm:$0xff] %vm12, -inf
    %20 = vst.msk [vmem:[%s1 + $0x38] sm:$0xff] %vm12, -inf
    %21 = vst.msk [vmem:[%s1 + $0x40] sm:$0xff] %vm12, -inf
    %22 = vst.msk [vmem:[%s1 + $0x48] sm:$0xff] %vm12, -inf
    %23 = vst.msk [vmem:[%s1 + $0x50] sm:$0xff] %vm12, -inf
    %24 = vst.msk [vmem:[%s1 + $0x58] sm:$0xff] %vm12, -inf
    %25 = vst.msk [vmem:[%s1 + $0x60] sm:$0xff] %vm12, -inf
    %26 = vst.msk [vmem:[%s1 + $0x68] sm:$0xff] %vm12, -inf
    %27 = vst.msk [vmem:[%s1 + $0x70] sm:$0xff] %vm12, -inf
    %28 = vst.msk [vmem:[%s1 + $0x78] sm:$0xff] %vm12, -inf
  $region9: #{tpu_custom_call.1} parent=0 // pred_fallthru
    _
  %v29 = vld [vmem:[%s1] sm:$0xff]
  %v30 = vld [vmem:[%s1 + $0x8] sm:$0xff]
  %v31 = vld [vmem:[%s1 + $0x10] sm:$0xff]
  %v32 = vld [vmem:[%s1 + $0x18] sm:$0xff]
  %v33 = vld [vmem:[%s1 + $0x20] sm:$0xff]
  %v34 = vld [vmem:[%s1 + $0x28] sm:$0xff]
  %v35 = vld [vmem:[%s1 + $0x30] sm:$0xff]
  %v36 = vld [vmem:[%s1 + $0x38] sm:$0xff]
  %v37 = vld [vmem:[%s1 + $0x40] sm:$0xff]
  %v38 = vld [vmem:[%s1 + $0x48] sm:$0xff]
  %v39 = vld [vmem:[%s1 + $0x50] sm:$0xff]
  %v40 = vld [vmem:[%s1 + $0x58] sm:$0xff]
  %v41 = vld [vmem:[%s1 + $0x60] sm:$0xff]
  %v42 = vld [vmem:[%s1 + $0x68] sm:$0xff]
  %v43 = vld [vmem:[%s1 + $0x70] sm:$0xff]
  %v44 = vld [vmem:[%s1 + $0x78] sm:$0xff]
  %v45 = vld [vmem:[%s0] sm:$0xff]
  %v46 = vld [vmem:[%s0 + $0x8] sm:$0xff]
  %v47 = vld [vmem:[%s0 + $0x10] sm:$0xff]
  %v48 = vld [vmem:[%s0 + $0x18] sm:$0xff]
  %v49 = vld [vmem:[%s0 + $0x20] sm:$0xff]
  %v50 = vld [vmem:[%s0 + $0x28] sm:$0xff]
  %v51 = vld [vmem:[%s0 + $0x30] sm:$0xff]
  %v52 = vld [vmem:[%s0 + $0x38] sm:$0xff]
  %v53 = vld [vmem:[%s0 + $0x40] sm:$0xff]
  %v54 = vld [vmem:[%s0 + $0x48] sm:$0xff]
  %v55 = vld [vmem:[%s0 + $0x50] sm:$0xff]
  %v56 = vld [vmem:[%s0 + $0x58] sm:$0xff]
  %v57 = vld [vmem:[%s0 + $0x60] sm:$0xff]
  %v58 = vld [vmem:[%s0 + $0x68] sm:$0xff]
  %v59 = vld [vmem:[%s0 + $0x70] sm:$0xff]
  %v60 = vld [vmem:[%s0 + $0x78] sm:$0xff]
  %vm61 = vcmask 130048
  %v62 = vsel %vm61, %v45, -inf
  %63 = vmax.xlane.f32.xlu0 %v62
  %v64 = vpop.xlane.xlu0 %63
  %v65 = vsel %vm61, %v46, -inf
  %66 = vmax.xlane.f32.xlu0 %v65
  %v67 = vpop.xlane.xlu0 %66
  %v68 = vsel %vm61, %v47, -inf
  %69 = vmax.xlane.f32.xlu0 %v68
  %v70 = vpop.xlane.xlu0 %69
  %v71 = vsel %vm61, %v48, -inf
  %72 = vmax.xlane.f32.xlu0 %v71
  %v73 = vpop.xlane.xlu0 %72
  %v74 = vsel %vm61, %v49, -inf
  %75 = vmax.xlane.f32.xlu0 %v74
  %v76 = vpop.xlane.xlu0 %75
  %v77 = vsel %vm61, %v50, -inf
  %78 = vmax.xlane.f32.xlu0 %v77
  %v79 = vpop.xlane.xlu0 %78
  %v80 = vsel %vm61, %v51, -inf
  %81 = vmax.xlane.f32.xlu0 %v80
  %v82 = vpop.xlane.xlu0 %81
  %v83 = vsel %vm61, %v52, -inf
  %84 = vmax.xlane.f32.xlu0 %v83
  %v85 = vpop.xlane.xlu0 %84
  %v86 = vsel %vm61, %v53, -inf
  %87 = vmax.xlane.f32.xlu0 %v86
  %v88 = vpop.xlane.xlu0 %87
  %v89 = vsel %vm61, %v54, -inf
  %90 = vmax.xlane.f32.xlu0 %v89
  %v91 = vpop.xlane.xlu0 %90
  %v92 = vsel %vm61, %v55, -inf
  %93 = vmax.xlane.f32.xlu0 %v92
  %v94 = vpop.xlane.xlu0 %93
  %v95 = vsel %vm61, %v56, -inf
  %96 = vmax.xlane.f32.xlu0 %v95
  %v97 = vpop.xlane.xlu0 %96
  %v98 = vsel %vm61, %v57, -inf
  %99 = vmax.xlane.f32.xlu0 %v98
  %v100 = vpop.xlane.xlu0 %99
  %v101 = vsel %vm61, %v58, -inf
  %102 = vmax.xlane.f32.xlu0 %v101
  %v103 = vpop.xlane.xlu0 %102
  %v104 = vsel %vm61, %v59, -inf
  %105 = vmax.xlane.f32.xlu0 %v104
  %v106 = vpop.xlane.xlu0 %105
  %v107 = vsel %vm61, %v60, -inf
  %108 = vmax.xlane.f32.xlu0 %v107
  %v109 = vpop.xlane.xlu0 %108
  %v110 = vmax.f32 %v29, %v64
  %v111 = vmax.f32 %v30, %v67
  %v112 = vmax.f32 %v31, %v70
  %v113 = vmax.f32 %v32, %v73
  %v114 = vmax.f32 %v33, %v76
  %v115 = vmax.f32 %v34, %v79
  %v116 = vmax.f32 %v35, %v82
  %v117 = vmax.f32 %v36, %v85
  %v118 = vmax.f32 %v37, %v88
  %v119 = vmax.f32 %v38, %v91
  %v120 = vmax.f32 %v39, %v94
  %v121 = vmax.f32 %v40, %v97
  %v122 = vmax.f32 %v41, %v100
  %v123 = vmax.f32 %v42, %v103
  %v124 = vmax.f32 %v43, %v106
  %v125 = vmax.f32 %v44, %v109
  %vm126 = vcmask 7168
  %127 = vst.msk [vmem:[%s1] sm:$0xff] %vm126, %v110
  %128 = vst.msk [vmem:[%s1 + $0x8] sm:$0xff] %vm126, %v111
  %129 = vst.msk [vmem:[%s1 + $0x10] sm:$0xff] %vm126, %v112
  %130 = vst.msk [vmem:[%s1 + $0x18] sm:$0xff] %vm126, %v113
  %131 = vst.msk [vmem:[%s1 + $0x20] sm:$0xff] %vm126, %v114
  %132 = vst.msk [vmem:[%s1 + $0x28] sm:$0xff] %vm126, %v115
  %133 = vst.msk [vmem:[%s1 + $0x30] sm:$0xff] %vm126, %v116
  %134 = vst.msk [vmem:[%s1 + $0x38] sm:$0xff] %vm126, %v117
  %135 = vst.msk [vmem:[%s1 + $0x40] sm:$0xff] %vm126, %v118
  %136 = vst.msk [vmem:[%s1 + $0x48] sm:$0xff] %vm126, %v119
  %137 = vst.msk [vmem:[%s1 + $0x50] sm:$0xff] %vm126, %v120
  %138 = vst.msk [vmem:[%s1 + $0x58] sm:$0xff] %vm126, %v121
  %139 = vst.msk [vmem:[%s1 + $0x60] sm:$0xff] %vm126, %v122
  %140 = vst.msk [vmem:[%s1 + $0x68] sm:$0xff] %vm126, %v123
  %141 = vst.msk [vmem:[%s1 + $0x70] sm:$0xff] %vm126, %v124
  %142 = vst.msk [vmem:[%s1 + $0x78] sm:$0xff] %vm126, %v125
  // Predicated region
  $region10: #{tpu_custom_call.1} parent=0 // pred_check
    _
  $region11: #{tpu_custom_call.1} parent=0 // pred_check_branch
    %144 = sbr.rel (0) target = $region13
  $region12: #{tpu_custom_call.1} parent=0 // pred_region
    _
  $region13: #{tpu_custom_call.1} parent=0 // pred_fallthru
    _
  // Predicated region
  $region14: #{tpu_custom_call.1} parent=0 // pred_check
    _
  $region15: #{tpu_custom_call.1} parent=0 // pred_check_branch
    %146 = sbr.rel (0) target = $region17
  $region16: #{tpu_custom_call.1} parent=0 // pred_region
    _
  $region17: #{tpu_custom_call.1} parent=0 // pred_fallthru
    _

</llo_original>
